<compile_context>
chip_gen: v7x
topology: tpu7x:2x2x1
jax: 0.10.0
libtpu: 0.0.40
codegen_flags: <defaults>
</compile_context>

<pallas_src>
import functools

import jax
import jax.numpy as jnp
from jax.experimental import pallas as pl
from jax.experimental.pallas import tpu as pltpu


def _disc_block_kernel(xf_ref, w_ref, o_ref, p_ref, sum_ref, *,
                       cin_p, wout, hw_tile, num_tiles, hw, eps, neg_slope,
                       unroll_finalize):
    # xf_ref : (1, 1, 8*Cp, hw_tile + Wout)  shift-decomposed input slab (compute dtype)
    # w_ref  : (Cout_blk, K)                  weight rows ordered (kh, kw, c), K = 16*Cp
    # o_ref  : (1, Cout_blk, HW)              resident across the hw-tile grid axis; also
    #                                         used to stage the pre-norm conv tiles
    # p_ref  : (K, hw_tile)                   in-VMEM im2col scratch
    # sum_ref: (Cout_blk, 1) f32              streamed per-channel sum (for the mean)
    t = pl.program_id(2)

    @pl.when(t == 0)
    def _init():
        sum_ref[...] = jnp.zeros_like(sum_ref)

    # ---- in-VMEM im2col: 16 static, sublane-aligned slab copies ---------------------
    # P[(kh*4 + kw)*Cp + c, p] = x_pad[c, 2*ho + kh, 2*wo + kw].  The kh//2 row shift is
    # a static lane offset of Wout (aligned whenever Wout % 128 == 0).
    for kh in range(4):
        col0 = (kh // 2) * wout
        for kw in range(4):
            src0 = (kw * 2 + (kh % 2)) * cin_p
            dst0 = (kh * 4 + kw) * cin_p
            p_ref[pl.ds(dst0, cin_p), :] = xf_ref[0, 0, pl.ds(src0, cin_p),
                                                  pl.ds(col0, hw_tile)]

    # ---- conv tile: one fused-K MXU matmul, lane-dense (Cout_blk, hw_tile) ----------
    # NOTE(perf): for Cout_blk <= 128 a weight-stationary orientation
    # dot(P^T, W^T) -> (hw_tile, Cout) reduces MXU stationary pushes but loses the
    # lane-dense NCHW store; keep current orientation until verified on a bundle dump.
    y = jnp.dot(w_ref[...], p_ref[...], preferred_element_type=jnp.float32)

    # ---- streamed per-channel sum (mean); variance is computed *centered* later -----
    sum_ref[...] += jnp.sum(y, axis=1, keepdims=True)

    # ---- stage the pre-norm tile in the resident output block (no extra scratch) ----
    if num_tiles > 1:
        if unroll_finalize:
            # fully static addressing (small tile counts)
            for s in range(num_tiles - 1):
                @pl.when(t == s)
                def _stage(s=s):
                    c0 = s * hw_tile
                    o_ref[0, :, c0:c0 + hw_tile] = y.astype(o_ref.dtype)
        else:
            @pl.when(t < num_tiles - 1)
            def _stage():
                col = t * hw_tile
                if hw_tile % 128 == 0:
                    col = pl.multiple_of(col, 128)
                o_ref[0, :, pl.ds(col, hw_tile)] = y.astype(o_ref.dtype)

    # ---- finalize: centered variance, normalize + LeakyReLU, lane-dense stores ------
    @pl.when(t == num_tiles - 1)
    def _finalize():
        inv_hw = 1.0 / hw
        mean = sum_ref[...] * inv_hw                                  # (Cout_blk, 1)

        def _csq(v):
            return jnp.sum(jnp.square(v - mean), axis=1, keepdims=True)

        csq = _csq(y)   # last tile straight from registers (never staged)
        if num_tiles > 1:
            if unroll_finalize:
                for s in range(num_tiles - 1):
                    blk = o_ref[0, :, s * hw_tile:(s + 1) * hw_tile]
                    csq = csq + _csq(blk.astype(jnp.float32))
            else:
                def _body(s, acc):
                    col = s * hw_tile
                    if hw_tile % 128 == 0:
                        col = pl.multiple_of(col, 128)
                    blk = o_ref[0, :, pl.ds(col, hw_tile)]
                    return acc + _csq(blk.astype(jnp.float32))
                csq = jax.lax.fori_loop(0, num_tiles - 1, _body, csq)

        var = jnp.maximum(csq * inv_hw, 0.0)                          # biased variance
        inv_std = jax.lax.rsqrt(var + eps)

        def _norm(v):
            yn = (v - mean) * inv_std
            return jnp.where(yn >= 0.0, yn, neg_slope * yn).astype(o_ref.dtype)

        last = (num_tiles - 1) * hw_tile
        o_ref[0, :, last:last + hw_tile] = _norm(y)
        if num_tiles > 1:
            if unroll_finalize:
                for s in range(num_tiles - 1):
                    c0 = s * hw_tile
                    o_ref[0, :, c0:c0 + hw_tile] = _norm(
                        o_ref[0, :, c0:c0 + hw_tile].astype(jnp.float32))
            else:
                @pl.loop(0, num_tiles - 1)
                def _norm_loop(s):
                    col = s * hw_tile
                    if hw_tile % 128 == 0:
                        col = pl.multiple_of(col, 128)
                    blk = o_ref[0, :, pl.ds(col, hw_tile)].astype(jnp.float32)
                    o_ref[0, :, pl.ds(col, hw_tile)] = _norm(blk)


def _vmem_budget(frac=0.8, fallback_bytes=64 * 1024 * 1024):
    """Hardware-aware VMEM budget: frac of physical VMEM (64 MiB v7x, 128 MiB v5e/v6e)."""
    try:
        cap = int(pltpu.get_tpu_info().vmem_capacity_bytes)
    except Exception:      # no TPU info available -> assume the smallest (v7x) part
        cap = fallback_bytes
    return int(cap * frac)


def _pick_cout_block(cout, hw, out_item, resid_budget):
    """Largest divisor of Cout whose double-buffered resident output block fits."""
    divs = sorted({d for d in range(1, cout + 1) if cout % d == 0}, reverse=True)
    cands = [d for d in divs if d == cout or d % 8 == 0] or divs
    for d in cands:
        if 2 * d * hw * out_item <= resid_budget:
            return d
    return min(cands)


def _pick_tile_rows(hout, wout, k, cp, c_item, slab_budget):
    """Largest divisor of Hout fitting the per-tile slab + patch scratch, preferring
    hw_tile = tile_rows*Wout aligned to 256 (then 128) lanes for unmasked MXU/vst."""
    divs = [d for d in range(1, hout + 1) if hout % d == 0]

    def cost(tr):
        hw_t = tr * wout
        return (k * hw_t * c_item                        # p_ref scratch
                + 2 * (8 * cp) * (hw_t + wout) * c_item)  # double-buffered input slab

    fitting = [d for d in divs if cost(d) <= slab_budget] or [1]
    for align in (256, 128):
        aligned = [d for d in fitting if (d * wout) % align == 0]
        if aligned:
            return max(aligned)
    return max(fitting)


def disc_block_forward(x, weight, *, stride=2, eps=1e-5, neg_slope=0.2,
                       compute_dtype=jnp.bfloat16, out_dtype=None,
                       tile_rows=None, cout_block=None):
    """DiscBlock forward.  x: (N, Cin, H, W) NCHW, weight: (Cout, Cin, 4, 4).
    Returns (N, Cout, H//2, W//2).

    Note: compute_dtype=bf16 quantizes x/weight before the conv (MXU native);
    pass compute_dtype=jnp.float32 for PyTorch-f32-matched conv semantics."""
    N, Cin, H, W = x.shape
    Cout, Cin_w, KH, KW = weight.shape
    assert (KH, KW) == (4, 4) and Cin_w == Cin
    if stride != 2:
        # TODO(synk): stride=1 DiscBlock variant (last PatchGAN layer) not implemented.
        raise NotImplementedError("DiscBlock Pallas kernel implements stride=2 only")
    assert H % 2 == 0 and W % 2 == 0 and H >= 4 and W >= 4

    Hout, Wout = H // 2, W // 2
    HW = Hout * Wout
    out_dtype = x.dtype if out_dtype is None else out_dtype
    c_item = jnp.dtype(compute_dtype).itemsize
    out_item = jnp.dtype(out_dtype).itemsize

    # Zero-pad Cin to a sublane multiple so all 16 im2col copies are aligned
    # (no-op for real PatchGAN channel counts 64/128/256).
    sub = 8 if c_item >= 4 else 16
    Cp = ((Cin + sub - 1) // sub) * sub
    K = 16 * Cp

    budget = _vmem_budget()

    # Bound the Cout*HW residency; also lets megacore split channels exactly on v7x.
    if cout_block is None:
        cout_block = _pick_cout_block(Cout, HW, out_item, resid_budget=budget // 2)
    assert Cout % cout_block == 0
    n_cb = Cout // cout_block

    resident = (2 * cout_block * HW * out_item      # resident output block (x2 buffers)
                + 2 * cout_block * K * c_item)      # weight block
    if resident > (3 * budget) // 4:
        # TODO(synk): two-pass fallback (pre-norm conv + per-channel stats to HBM, then
        # a tiny normalize+LeakyReLU pass) for images whose Cout*HW cannot fit VMEM.
        raise ValueError(
            f"DiscBlock residency {resident} B exceeds the VMEM budget {budget} B; "
            "reduce the image size / Cout or implement the two-pass fallback.")

    if tile_rows is None:
        tile_rows = _pick_tile_rows(Hout, Wout, K, Cp, c_item,
                                    slab_budget=budget - resident)
    assert Hout % tile_rows == 0
    n_tiles = Hout // tile_rows
    hw_tile = tile_rows * Wout
    slab_w = hw_tile + Wout            # one extra output row of overlap for kh in {2,3}

    # ---- O(|x|) layout prep, built in ONE pass from the reflect-padded input --------
    xc = x.astype(compute_dtype)
    if Cp != Cin:
        xc = jnp.pad(xc, ((0, 0), (0, Cp - Cin), (0, 0), (0, 0)))
    xpp = jnp.pad(xc, ((0, 0), (0, 0), (1, 1), (1, 1)), mode="reflect")  # (N,Cp,H+2,W+2)

    parts = []
    for t in range(n_tiles):
        r0 = 2 * t * tile_rows
        for kw in range(KW):
            for ph in range(2):        # input-row parity == kh % 2
                blk = xpp[:, :, r0 + ph: r0 + ph + 2 * (tile_rows + 1): 2,
                          kw: kw + 2 * Wout: 2][:, :, :tile_rows + 1, :Wout]
                parts.append(blk)      # (N, Cp, tile_rows+1, Wout)
    # Single stack => single HBM materialization of the slab array.
    xf = jnp.stack(parts, axis=1).reshape(N, n_tiles, 8 * Cp, slab_w)

    # Weight as (Cout, K), K ordered (kh, kw, c) over the zero-padded channels.
    wp = weight if Cp == Cin else jnp.pad(weight,
                                          ((0, 0), (0, Cp - Cin), (0, 0), (0, 0)))
    w2 = jnp.transpose(wp, (0, 2, 3, 1)).reshape(Cout, K).astype(compute_dtype)

    kernel = functools.partial(
        _disc_block_kernel, cin_p=Cp, wout=Wout, hw_tile=hw_tile,
        num_tiles=n_tiles, hw=HW, eps=eps, neg_slope=neg_slope,
        unroll_finalize=(n_tiles <= 8))

    est_vmem = (2 * (8 * Cp) * slab_w * c_item      # input slab (double-buffered)
                + resident                          # weights + resident output block
                + K * hw_tile * c_item              # patch scratch
                + 8 * 128 * 4)                      # stats scratch (padded)
    vmem_limit = int(min(budget, max(2 * est_vmem, 16 * 1024 * 1024)))

    out = pl.pallas_call(
        kernel,
        out_shape=jax.ShapeDtypeStruct((N, Cout, HW), out_dtype),
        grid_spec=pltpu.PrefetchScalarGridSpec(
            num_scalar_prefetch=0,
            grid=(N, n_cb, n_tiles),
            in_specs=[
                pl.BlockSpec((1, 1, 8 * Cp, slab_w), lambda n, cb, t: (n, t, 0, 0)),
                pl.BlockSpec((cout_block, K), lambda n, cb, t: (cb, 0)),
            ],
            out_specs=pl.BlockSpec((1, cout_block, HW), lambda n, cb, t: (n, cb, 0)),
            scratch_shapes=[
                pltpu.VMEM((K, hw_tile), compute_dtype),    # im2col patch matrix
                pltpu.VMEM((cout_block, 1), jnp.float32),   # per-channel sum
            ],
        ),
        compiler_params=pltpu.CompilerParams(
            dimension_semantics=("parallel", "parallel", "arbitrary"),
            vmem_limit_bytes=vmem_limit,
        ),
    )(xf, w2)

    # Output is already lane-dense NCHW (N, Cout, HW): free reshape, no HBM transpose.
    return out.reshape(N, Cout, Hout, Wout)


def _reference(x, weight, stride=2, eps=1e-5, neg_slope=0.2,
               compute_dtype=jnp.float32):
    xp = jnp.pad(x, ((0, 0), (0, 0), (1, 1), (1, 1)), mode="reflect")
    y = jax.lax.conv_general_dilated(
        xp.astype(compute_dtype), weight.astype(compute_dtype),
        window_strides=(stride, stride), padding="VALID",
        dimension_numbers=("NCHW", "OIHW", "NCHW"),
        preferred_element_type=jnp.float32)
    mean = jnp.mean(y, axis=(2, 3), keepdims=True)
    var = jnp.mean(jnp.square(y - mean), axis=(2, 3), keepdims=True)
    yn = (y - mean) * jax.lax.rsqrt(var + eps)
    return jnp.where(yn >= 0, yn, neg_slope * yn).astype(x.dtype)


if __name__ == "__main__":
    key = jax.random.PRNGKey(0)
    kx, kwt, kx2, kwt2 = jax.random.split(key, 4)

    fwd = jax.jit(disc_block_forward,
                  static_argnames=("stride", "eps", "neg_slope", "compute_dtype",
                                   "out_dtype", "tile_rows", "cout_block"))

    # Case 1: spec-sized shapes, f32 MXU path -> exact-semantics check vs f32 reference.
    N, Cin, H, W, Cout = 2, 4, 16, 16, 8
    x = jax.random.normal(kx, (N, Cin, H, W), dtype=jnp.float32)
    wgt = jax.random.normal(kwt, (Cout, Cin, 4, 4), dtype=jnp.float32) * 0.1

    out_f32 = jax.block_until_ready(fwd(x, wgt, compute_dtype=jnp.float32))
    ref_f32 = _reference(x, wgt, compute_dtype=jnp.float32)
    assert out_f32.shape == (N, Cout, 8, 8), out_f32.shape
    assert jnp.allclose(out_f32, ref_f32, atol=1e-4, rtol=1e-4), "f32 mismatch"

    # Case 2: same shapes, default bf16 MXU operands (vs bf16-matched reference).
    out_bf = jax.block_until_ready(fwd(x, wgt))
    ref_bf = _reference(x, wgt, compute_dtype=jnp.bfloat16)
    assert jnp.allclose(out_bf, ref_bf, atol=1e-2, rtol=1e-2), "bf16 mismatch"

    # Case 3: larger image, forced multi-tile -> exercises streamed stats, staged
    # pre-norm tiles in the resident output block, and the centered-variance finalize.
    N2, Cin2, H2, W2, Cout2 = 2, 8, 32, 32, 16
    x2 = jax.random.normal(kx2, (N2, Cin2, H2, W2), dtype=jnp.float32)
    wgt2 = jax.random.normal(kwt2, (Cout2, Cin2, 4, 4), dtype=jnp.float32) * 0.1

    out2 = jax.block_until_ready(fwd(x2, wgt2, tile_rows=4))
    ref2 = _reference(x2, wgt2, compute_dtype=jnp.bfloat16)
    assert out2.shape == (N2, Cout2, 16, 16), out2.shape
    assert jnp.allclose(out2, ref2, atol=1e-2, rtol=1e-2), "multi-tile mismatch"

    print("KERNEL_OK")
</pallas_src>

<mosaic_0001>
module attributes {stable_mosaic.version = 11 : i64} {
  func.func @_disc_block_kernel(%arg0: i32, %arg1: i32, %arg2: i32, %arg3: memref<1x1x64x72xf32, #tpu.memory_space<vmem>>, %arg4: memref<8x128xf32, #tpu.memory_space<vmem>>, %arg5: memref<1x8x64xf32, #tpu.memory_space<vmem>>, %arg6: memref<128x64xf32, #tpu.memory_space<vmem>>, %arg7: memref<8x1xf32, #tpu.memory_space<vmem>>) attributes {dimension_semantics = [#tpu.dimension_semantics<parallel>, #tpu.dimension_semantics<parallel>, #tpu.dimension_semantics<arbitrary>], iteration_bounds = array<i64: 2, 1, 1>, scalar_prefetch = 0 : i64, scratch_operands = 2 : i64, tpu.core_type = #tpu.core_type<tc>, window_params = [{transform_indices = @transform_0, window_bounds = array<i64: 1, 1, 64, 72>}, {transform_indices = @transform_1, window_bounds = array<i64: 8, 128>}, {transform_indices = @transform_2, window_bounds = array<i64: 1, 8, 64>}]} {
    %c0_i32 = arith.constant 0 : i32
    %0 = arith.cmpi eq, %arg2, %c0_i32 : i32
    %1 = arith.extui %0 : i1 to i32
    %c0_i32_0 = arith.constant 0 : i32
    %2 = arith.cmpi ne, %1, %c0_i32_0 : i32
    scf.if %2 {
      %cst_92 = arith.constant 0.000000e+00 : f32
      %62 = vector.broadcast %cst_92 : f32 to vector<8x1xf32>
      %c0_93 = arith.constant 0 : index
      %c0_94 = arith.constant 0 : index
      %63 = vector.load %arg7[%c0_93, %c0_94] : memref<8x1xf32, #tpu.memory_space<vmem>>, vector<8x1xf32>
      tpu.vector_store %arg7[%c0_93, %c0_94], %62 {strides = array<i32>} : memref<8x1xf32, #tpu.memory_space<vmem>>, vector<8x1xf32>,
    } else {
    }
    %c0 = arith.constant 0 : index
    %c0_1 = arith.constant 0 : index
    %c0_2 = arith.constant 0 : index
    %c0_3 = arith.constant 0 : index
    %3 = vector.load %arg3[%c0, %c0_1, %c0_2, %c0_3] : memref<1x1x64x72xf32, #tpu.memory_space<vmem>>, vector<1x1x8x64xf32>
    %4 = vector.shape_cast %3 : vector<1x1x8x64xf32> to vector<8x64xf32>
    %c0_4 = arith.constant 0 : index
    %c0_5 = arith.constant 0 : index
    %5 = vector.load %arg6[%c0_4, %c0_5] : memref<128x64xf32, #tpu.memory_space<vmem>>, vector<8x64xf32>
    tpu.vector_store %arg6[%c0_4, %c0_5], %4 {strides = array<i32>} : memref<128x64xf32, #tpu.memory_space<vmem>>, vector<8x64xf32>,
    %c0_6 = arith.constant 0 : index
    %c0_7 = arith.constant 0 : index
    %c16 = arith.constant 16 : index
    %c0_8 = arith.constant 0 : index
    %6 = vector.load %arg3[%c0_6, %c0_7, %c16, %c0_8] : memref<1x1x64x72xf32, #tpu.memory_space<vmem>>, vector<1x1x8x64xf32>
    %7 = vector.shape_cast %6 : vector<1x1x8x64xf32> to vector<8x64xf32>
    %c8 = arith.constant 8 : index
    %c0_9 = arith.constant 0 : index
    %8 = vector.load %arg6[%c8, %c0_9] : memref<128x64xf32, #tpu.memory_space<vmem>>, vector<8x64xf32>
    tpu.vector_store %arg6[%c8, %c0_9], %7 {strides = array<i32>} : memref<128x64xf32, #tpu.memory_space<vmem>>, vector<8x64xf32>,
    %c0_10 = arith.constant 0 : index
    %c0_11 = arith.constant 0 : index
    %c32 = arith.constant 32 : index
    %c0_12 = arith.constant 0 : index
    %9 = vector.load %arg3[%c0_10, %c0_11, %c32, %c0_12] : memref<1x1x64x72xf32, #tpu.memory_space<vmem>>, vector<1x1x8x64xf32>
    %10 = vector.shape_cast %9 : vector<1x1x8x64xf32> to vector<8x64xf32>
    %c16_13 = arith.constant 16 : index
    %c0_14 = arith.constant 0 : index
    %11 = vector.load %arg6[%c16_13, %c0_14] : memref<128x64xf32, #tpu.memory_space<vmem>>, vector<8x64xf32>
    tpu.vector_store %arg6[%c16_13, %c0_14], %10 {strides = array<i32>} : memref<128x64xf32, #tpu.memory_space<vmem>>, vector<8x64xf32>,
    %c0_15 = arith.constant 0 : index
    %c0_16 = arith.constant 0 : index
    %c48 = arith.constant 48 : index
    %c0_17 = arith.constant 0 : index
    %12 = vector.load %arg3[%c0_15, %c0_16, %c48, %c0_17] : memref<1x1x64x72xf32, #tpu.memory_space<vmem>>, vector<1x1x8x64xf32>
    %13 = vector.shape_cast %12 : vector<1x1x8x64xf32> to vector<8x64xf32>
    %c24 = arith.constant 24 : index
    %c0_18 = arith.constant 0 : index
    %14 = vector.load %arg6[%c24, %c0_18] : memref<128x64xf32, #tpu.memory_space<vmem>>, vector<8x64xf32>
    tpu.vector_store %arg6[%c24, %c0_18], %13 {strides = array<i32>} : memref<128x64xf32, #tpu.memory_space<vmem>>, vector<8x64xf32>,
    %c0_19 = arith.constant 0 : index
    %c0_20 = arith.constant 0 : index
    %c8_21 = arith.constant 8 : index
    %c0_22 = arith.constant 0 : index
    %15 = vector.load %arg3[%c0_19, %c0_20, %c8_21, %c0_22] : memref<1x1x64x72xf32, #tpu.memory_space<vmem>>, vector<1x1x8x64xf32>
    %16 = vector.shape_cast %15 : vector<1x1x8x64xf32> to vector<8x64xf32>
    %c32_23 = arith.constant 32 : index
    %c0_24 = arith.constant 0 : index
    %17 = vector.load %arg6[%c32_23, %c0_24] : memref<128x64xf32, #tpu.memory_space<vmem>>, vector<8x64xf32>
    tpu.vector_store %arg6[%c32_23, %c0_24], %16 {strides = array<i32>} : memref<128x64xf32, #tpu.memory_space<vmem>>, vector<8x64xf32>,
    %c0_25 = arith.constant 0 : index
    %c0_26 = arith.constant 0 : index
    %c24_27 = arith.constant 24 : index
    %c0_28 = arith.constant 0 : index
    %18 = vector.load %arg3[%c0_25, %c0_26, %c24_27, %c0_28] : memref<1x1x64x72xf32, #tpu.memory_space<vmem>>, vector<1x1x8x64xf32>
    %19 = vector.shape_cast %18 : vector<1x1x8x64xf32> to vector<8x64xf32>
    %c40 = arith.constant 40 : index
    %c0_29 = arith.constant 0 : index
    %20 = vector.load %arg6[%c40, %c0_29] : memref<128x64xf32, #tpu.memory_space<vmem>>, vector<8x64xf32>
    tpu.vector_store %arg6[%c40, %c0_29], %19 {strides = array<i32>} : memref<128x64xf32, #tpu.memory_space<vmem>>, vector<8x64xf32>,
    %c0_30 = arith.constant 0 : index
    %c0_31 = arith.constant 0 : index
    %c40_32 = arith.constant 40 : index
    %c0_33 = arith.constant 0 : index
    %21 = vector.load %arg3[%c0_30, %c0_31, %c40_32, %c0_33] : memref<1x1x64x72xf32, #tpu.memory_space<vmem>>, vector<1x1x8x64xf32>
    %22 = vector.shape_cast %21 : vector<1x1x8x64xf32> to vector<8x64xf32>
    %c48_34 = arith.constant 48 : index
    %c0_35 = arith.constant 0 : index
    %23 = vector.load %arg6[%c48_34, %c0_35] : memref<128x64xf32, #tpu.memory_space<vmem>>, vector<8x64xf32>
    tpu.vector_store %arg6[%c48_34, %c0_35], %22 {strides = array<i32>} : memref<128x64xf32, #tpu.memory_space<vmem>>, vector<8x64xf32>,
    %c0_36 = arith.constant 0 : index
    %c0_37 = arith.constant 0 : index
    %c56 = arith.constant 56 : index
    %c0_38 = arith.constant 0 : index
    %24 = vector.load %arg3[%c0_36, %c0_37, %c56, %c0_38] : memref<1x1x64x72xf32, #tpu.memory_space<vmem>>, vector<1x1x8x64xf32>
    %25 = vector.shape_cast %24 : vector<1x1x8x64xf32> to vector<8x64xf32>
    %c56_39 = arith.constant 56 : index
    %c0_40 = arith.constant 0 : index
    %26 = vector.load %arg6[%c56_39, %c0_40] : memref<128x64xf32, #tpu.memory_space<vmem>>, vector<8x64xf32>
    tpu.vector_store %arg6[%c56_39, %c0_40], %25 {strides = array<i32>} : memref<128x64xf32, #tpu.memory_space<vmem>>, vector<8x64xf32>,
    %c0_41 = arith.constant 0 : index
    %c0_42 = arith.constant 0 : index
    %c0_43 = arith.constant 0 : index
    %c8_44 = arith.constant 8 : index
    %27 = vector.load %arg3[%c0_41, %c0_42, %c0_43, %c8_44] : memref<1x1x64x72xf32, #tpu.memory_space<vmem>>, vector<1x1x8x64xf32>
    %28 = vector.shape_cast %27 : vector<1x1x8x64xf32> to vector<8x64xf32>
    %c64 = arith.constant 64 : index
    %c0_45 = arith.constant 0 : index
    %29 = vector.load %arg6[%c64, %c0_45] : memref<128x64xf32, #tpu.memory_space<vmem>>, vector<8x64xf32>
    tpu.vector_store %arg6[%c64, %c0_45], %28 {strides = array<i32>} : memref<128x64xf32, #tpu.memory_space<vmem>>, vector<8x64xf32>,
    %c0_46 = arith.constant 0 : index
    %c0_47 = arith.constant 0 : index
    %c16_48 = arith.constant 16 : index
    %c8_49 = arith.constant 8 : index
    %30 = vector.load %arg3[%c0_46, %c0_47, %c16_48, %c8_49] : memref<1x1x64x72xf32, #tpu.memory_space<vmem>>, vector<1x1x8x64xf32>
    %31 = vector.shape_cast %30 : vector<1x1x8x64xf32> to vector<8x64xf32>
    %c72 = arith.constant 72 : index
    %c0_50 = arith.constant 0 : index
    %32 = vector.load %arg6[%c72, %c0_50] : memref<128x64xf32, #tpu.memory_space<vmem>>, vector<8x64xf32>
    tpu.vector_store %arg6[%c72, %c0_50], %31 {strides = array<i32>} : memref<128x64xf32, #tpu.memory_space<vmem>>, vector<8x64xf32>,
    %c0_51 = arith.constant 0 : index
    %c0_52 = arith.constant 0 : index
    %c32_53 = arith.constant 32 : index
    %c8_54 = arith.constant 8 : index
    %33 = vector.load %arg3[%c0_51, %c0_52, %c32_53, %c8_54] : memref<1x1x64x72xf32, #tpu.memory_space<vmem>>, vector<1x1x8x64xf32>
    %34 = vector.shape_cast %33 : vector<1x1x8x64xf32> to vector<8x64xf32>
    %c80 = arith.constant 80 : index
    %c0_55 = arith.constant 0 : index
    %35 = vector.load %arg6[%c80, %c0_55] : memref<128x64xf32, #tpu.memory_space<vmem>>, vector<8x64xf32>
    tpu.vector_store %arg6[%c80, %c0_55], %34 {strides = array<i32>} : memref<128x64xf32, #tpu.memory_space<vmem>>, vector<8x64xf32>,
    %c0_56 = arith.constant 0 : index
    %c0_57 = arith.constant 0 : index
    %c48_58 = arith.constant 48 : index
    %c8_59 = arith.constant 8 : index
    %36 = vector.load %arg3[%c0_56, %c0_57, %c48_58, %c8_59] : memref<1x1x64x72xf32, #tpu.memory_space<vmem>>, vector<1x1x8x64xf32>
    %37 = vector.shape_cast %36 : vector<1x1x8x64xf32> to vector<8x64xf32>
    %c88 = arith.constant 88 : index
    %c0_60 = arith.constant 0 : index
    %38 = vector.load %arg6[%c88, %c0_60] : memref<128x64xf32, #tpu.memory_space<vmem>>, vector<8x64xf32>
    tpu.vector_store %arg6[%c88, %c0_60], %37 {strides = array<i32>} : memref<128x64xf32, #tpu.memory_space<vmem>>, vector<8x64xf32>,
    %c0_61 = arith.constant 0 : index
    %c0_62 = arith.constant 0 : index
    %c8_63 = arith.constant 8 : index
    %c8_64 = arith.constant 8 : index
    %39 = vector.load %arg3[%c0_61, %c0_62, %c8_63, %c8_64] : memref<1x1x64x72xf32, #tpu.memory_space<vmem>>, vector<1x1x8x64xf32>
    %40 = vector.shape_cast %39 : vector<1x1x8x64xf32> to vector<8x64xf32>
    %c96 = arith.constant 96 : index
    %c0_65 = arith.constant 0 : index
    %41 = vector.load %arg6[%c96, %c0_65] : memref<128x64xf32, #tpu.memory_space<vmem>>, vector<8x64xf32>
    tpu.vector_store %arg6[%c96, %c0_65], %40 {strides = array<i32>} : memref<128x64xf32, #tpu.memory_space<vmem>>, vector<8x64xf32>,
    %c0_66 = arith.constant 0 : index
    %c0_67 = arith.constant 0 : index
    %c24_68 = arith.constant 24 : index
    %c8_69 = arith.constant 8 : index
    %42 = vector.load %arg3[%c0_66, %c0_67, %c24_68, %c8_69] : memref<1x1x64x72xf32, #tpu.memory_space<vmem>>, vector<1x1x8x64xf32>
    %43 = vector.shape_cast %42 : vector<1x1x8x64xf32> to vector<8x64xf32>
    %c104 = arith.constant 104 : index
    %c0_70 = arith.constant 0 : index
    %44 = vector.load %arg6[%c104, %c0_70] : memref<128x64xf32, #tpu.memory_space<vmem>>, vector<8x64xf32>
    tpu.vector_store %arg6[%c104, %c0_70], %43 {strides = array<i32>} : memref<128x64xf32, #tpu.memory_space<vmem>>, vector<8x64xf32>,
    %c0_71 = arith.constant 0 : index
    %c0_72 = arith.constant 0 : index
    %c40_73 = arith.constant 40 : index
    %c8_74 = arith.constant 8 : index
    %45 = vector.load %arg3[%c0_71, %c0_72, %c40_73, %c8_74] : memref<1x1x64x72xf32, #tpu.memory_space<vmem>>, vector<1x1x8x64xf32>
    %46 = vector.shape_cast %45 : vector<1x1x8x64xf32> to vector<8x64xf32>
    %c112 = arith.constant 112 : index
    %c0_75 = arith.constant 0 : index
    %47 = vector.load %arg6[%c112, %c0_75] : memref<128x64xf32, #tpu.memory_space<vmem>>, vector<8x64xf32>
    tpu.vector_store %arg6[%c112, %c0_75], %46 {strides = array<i32>} : memref<128x64xf32, #tpu.memory_space<vmem>>, vector<8x64xf32>,
    %c0_76 = arith.constant 0 : index
    %c0_77 = arith.constant 0 : index
    %c56_78 = arith.constant 56 : index
    %c8_79 = arith.constant 8 : index
    %48 = vector.load %arg3[%c0_76, %c0_77, %c56_78, %c8_79] : memref<1x1x64x72xf32, #tpu.memory_space<vmem>>, vector<1x1x8x64xf32>
    %49 = vector.shape_cast %48 : vector<1x1x8x64xf32> to vector<8x64xf32>
    %c120 = arith.constant 120 : index
    %c0_80 = arith.constant 0 : index
    %50 = vector.load %arg6[%c120, %c0_80] : memref<128x64xf32, #tpu.memory_space<vmem>>, vector<8x64xf32>
    tpu.vector_store %arg6[%c120, %c0_80], %49 {strides = array<i32>} : memref<128x64xf32, #tpu.memory_space<vmem>>, vector<8x64xf32>,
    %c0_81 = arith.constant 0 : index
    %c0_82 = arith.constant 0 : index
    %51 = vector.load %arg4[%c0_81, %c0_82] : memref<8x128xf32, #tpu.memory_space<vmem>>, vector<8x128xf32>
    %c0_83 = arith.constant 0 : index
    %c0_84 = arith.constant 0 : index
    %52 = vector.load %arg6[%c0_83, %c0_84] : memref<128x64xf32, #tpu.memory_space<vmem>>, vector<128x64xf32>
    %cst = arith.constant dense<0.000000e+00> : vector<8x64xf32>
    %53 = tpu.matmul %51, %52, %cst {dimension_numbers = #tpu.dot_dimension_numbers<[1], [0], [0], [1], [0, 0, 1, 1], [], []>} : vector<8x128xf32>, vector<128x64xf32>, vector<8x64xf32> -> vector<8x64xf32>
    %c0_85 = arith.constant 0 : index
    %c0_86 = arith.constant 0 : index
    %54 = vector.load %arg7[%c0_85, %c0_86] : memref<8x1xf32, #tpu.memory_space<vmem>>, vector<8x1xf32>
    %cst_87 = arith.constant dense<0.000000e+00> : vector<8xf32>
    %55 = vector.multi_reduction <add>, %53, %cst_87 [1] : vector<8x64xf32> to vector<8xf32>
    %56 = vector.shape_cast %55 : vector<8xf32> to vector<8x1xf32>
    %57 = arith.addf %54, %56 : vector<8x1xf32>
    %c0_88 = arith.constant 0 : index
    %c0_89 = arith.constant 0 : index
    %58 = vector.load %arg7[%c0_88, %c0_89] : memref<8x1xf32, #tpu.memory_space<vmem>>, vector<8x1xf32>
    tpu.vector_store %arg7[%c0_88, %c0_89], %57 {strides = array<i32>} : memref<8x1xf32, #tpu.memory_space<vmem>>, vector<8x1xf32>,
    %c0_i32_90 = arith.constant 0 : i32
    %59 = arith.cmpi eq, %arg2, %c0_i32_90 : i32
    %60 = arith.extui %59 : i1 to i32
    %c0_i32_91 = arith.constant 0 : i32
    %61 = arith.cmpi ne, %60, %c0_i32_91 : i32
    scf.if %61 {
      %c0_92 = arith.constant 0 : index
      %c0_93 = arith.constant 0 : index
      %62 = vector.load %arg7[%c0_92, %c0_93] : memref<8x1xf32, #tpu.memory_space<vmem>>, vector<8x1xf32>
      %cst_94 = arith.constant 1.562500e-02 : f32
      %63 = vector.broadcast %cst_94 : f32 to vector<8x1xf32>
      %64 = arith.mulf %62, %63 : vector<8x1xf32>
      %65 = vector.broadcast %64 : vector<8x1xf32> to vector<8x64xf32>
      %66 = arith.subf %53, %65 : vector<8x64xf32>
      %67 = arith.mulf %66, %66 : vector<8x64xf32>
      %cst_95 = arith.constant dense<0.000000e+00> : vector<8xf32>
      %68 = vector.multi_reduction <add>, %67, %cst_95 [1] : vector<8x64xf32> to vector<8xf32>
      %69 = vector.shape_cast %68 : vector<8xf32> to vector<8x1xf32>
      %cst_96 = arith.constant 1.562500e-02 : f32
      %70 = vector.broadcast %cst_96 : f32 to vector<8x1xf32>
      %71 = arith.mulf %69, %70 : vector<8x1xf32>
      %cst_97 = arith.constant 0.000000e+00 : f32
      %72 = vector.broadcast %cst_97 : f32 to vector<8x1xf32>
      %73 = arith.maximumf %71, %72 : vector<8x1xf32>
      %cst_98 = arith.constant 9.99999974E-6 : f32
      %74 = vector.broadcast %cst_98 : f32 to vector<8x1xf32>
      %75 = arith.addf %73, %74 : vector<8x1xf32>
      %76 = math.rsqrt %75 : vector<8x1xf32>
      %77 = vector.broadcast %64 : vector<8x1xf32> to vector<8x64xf32>
      %78 = arith.subf %53, %77 : vector<8x64xf32>
      %79 = vector.broadcast %76 : vector<8x1xf32> to vector<8x64xf32>
      %80 = arith.mulf %78, %79 : vector<8x64xf32>
      %cst_99 = arith.constant 0.000000e+00 : f32
      %81 = vector.broadcast %cst_99 : f32 to vector<8x64xf32>
      %82 = arith.cmpf oge, %80, %81 : vector<8x64xf32>
      %cst_100 = arith.constant 2.000000e-01 : f32
      %83 = vector.broadcast %cst_100 : f32 to vector<8x64xf32>
      %84 = arith.mulf %83, %80 : vector<8x64xf32>
      %85 = arith.select %82, %80, %84 : vector<8x64xi1>, vector<8x64xf32>
      %c0_101 = arith.constant 0 : index
      %c0_102 = arith.constant 0 : index
      %c0_103 = arith.constant 0 : index
      %86 = vector.load %arg5[%c0_101, %c0_102, %c0_103] : memref<1x8x64xf32, #tpu.memory_space<vmem>>, vector<1x8x64xf32>
      %87 = vector.shape_cast %86 : vector<1x8x64xf32> to vector<8x64xf32>
      %88 = vector.shape_cast %85 : vector<8x64xf32> to vector<1x8x64xf32>
      tpu.vector_store %arg5[%c0_101, %c0_102, %c0_103], %88 {strides = array<i32>} : memref<1x8x64xf32, #tpu.memory_space<vmem>>, vector<1x8x64xf32>,
    } else {
    }
    return
  }
  func.func @transform_0(%arg0: i32, %arg1: i32, %arg2: i32) -> (i32, i32, i32, i32) {
    %c0_i32 = arith.constant 0 : i32
    %c0_i32_0 = arith.constant 0 : i32
    %c0_i32_1 = arith.constant 0 : i32
    return %arg0, %arg2, %c0_i32, %c0_i32_0 : i32, i32, i32, i32
  }
  func.func @transform_1(%arg0: i32, %arg1: i32, %arg2: i32) -> (i32, i32) {
    %c0_i32 = arith.constant 0 : i32
    %c0_i32_0 = arith.constant 0 : i32
    return %arg1, %c0_i32 : i32, i32
  }
  func.func @transform_2(%arg0: i32, %arg1: i32, %arg2: i32) -> (i32, i32, i32) {
    %c0_i32 = arith.constant 0 : i32
    %c0_i32_0 = arith.constant 0 : i32
    return %arg0, %arg1, %c0_i32 : i32, i32, i32
  }
}

</mosaic_0001>

<llo_original>
// kernel: disc_block_forward.1
$region0: #{disc_block_forward.1}
  #allocation0 [shape = 'u32[]', space=smem, size = 0x4, offset = 0x4, fixed_abs, tag = 'smem constant byte address 0x4 - core index']
  #allocation1 [shape = 'u32[144,128]{1,0:T(1,128)}', space=vmem, size = 0x12000, scoped, tag = 'internal scratch']
  #allocation2 [shape = 'f32[128,64]{1,0:T(8,128)}', space=vmem, size = 0x10000, scoped, tag = 'scratch operand']
  #allocation3 [shape = 'f32[8,1]{1,0:T(8,128)}', space=vmem, size = 0x1000, scoped, tag = 'scratch operand']
  %s0 = inlined_call_operand.vmem [shape: f32[2,1,64,72], index: 0, kind: input, shape index: {}]
  %s1 = inlined_call_operand.vmem [shape: f32[8,128], index: 1, kind: input, shape index: {}]
  %s2 = inlined_call_operand.vmem [shape: f32[2,8,64], index: 2, kind: output, shape index: {}]
  %s3 = sld [smem:[#allocation0]]
  $region49: #{disc_block_forward.1} parent=0
    _
  %s5 = ssub.s32 1, %s3
  %s6 = scalar_select 0, %s5, %s3
  loop: start=0, step=1, limit=4
  $region2: #{disc_block_forward.1} parent=0 // loop_pre_header
    _
  $region3: #{disc_block_forward.1} parent=0 // loop_header
    %s8 = sphi 0, %s12
    %p9 = scmp.ge.s32.totalorder %s8, 4
    %s15 = sphi 0, %s34
    %s16 = sphi 0, %s30
    %s17 = sphi 0, %s26
    %s18 = sphi 0, %s15
    %s19 = sphi 0, %s16
    %s20 = sphi 0, %s17
    %s21 = sphi 0, %s18
    %s22 = sphi 0, %s19
    %s23 = sphi 0, %s20
    %s39 = sphi 0, %s41
    %s42 = sphi 0, %s39
    %s43 = sphi 0, %s42
    %s59 = sphi 0, %s43
    %s65 = sphi 0, %s67
    %s68 = sphi 0, %s65
    %s69 = sphi 0, %s68
    %s85 = sphi 0, %s69
    %s93 = sphi 0, %s95
    %s96 = sphi 0, %s93
    %s97 = sphi 0, %s96
    %s113 = sphi 0, %s97
  $region4: #{disc_block_forward.1} parent=0 // loop_header_branch
    %11 = sbr.rel (%p9) target = $region8
  $region5: #{disc_block_forward.1} parent=0 // loop_body
    %s13 = ssub.s32 %s8, 1
    %s14 = ssub.s32 %s8, 2
    %s24 = sadd.s32 1, %s17
    %p25 = scmp.ge.s32.totalorder %s24, 1
    %s26 = scalar_select %p25, 0, %s24
    %s27 = sadd.s32 1, %s16
    %s28 = scalar_select %p25, %s27, %s16
    %p29 = scmp.ge.s32.totalorder %s28, 1
    %s30 = scalar_select %p29, 0, %s28
    %s31 = sadd.s32 1, %s15
    %s32 = scalar_select %p29, %s31, %s15
    %p33 = scmp.ge.s32.totalorder %s32, 2
    %s34 = scalar_select %p33, 0, %s32
    %s35 = ssub.s32 %s15, %s34
    %s36 = ssub.s32 %s17, %s26
    %s37 = sor.u32 %s35, %s36
    %p38 = scmp.eq.s32.totalorder %s37, 0
    %s40 = sadd.s32 %s39, 1
    %s41 = scalar_select %p38, %s39, %s40
    %p44 = pneg %p38
    %p45 = scmp.eq.s32.totalorder %s8, 1
    %p46 = por %p44, %p45
    %p47 = scmp.ne.s32.totalorder %s39, %s42
    %p48 = scmp.eq.s32.totalorder %s8, 0
    %p49 = por %p47, %p48
    %p50 = scmp.ne.s32.totalorder %s39, %s42
    %p51 = scmp.eq.s32.totalorder %s13, 1
    %p52 = por %p50, %p51
    %p53 = scmp.ne.s32.totalorder %s42, %s43
    %p54 = scmp.eq.s32.totalorder %s13, 0
    %p55 = por %p53, %p54
    %p56 = scmp.ne.s32.totalorder %s42, %s43
    %p57 = scmp.eq.s32.totalorder %s14, 1
    %p58 = por %p56, %p57
    %p60 = scmp.ne.s32.totalorder %s43, %s59
    %p61 = scmp.eq.s32.totalorder %s14, 0
    %p62 = por %p60, %p61
    %s63 = ssub.s32 %s16, %s30
    %p64 = scmp.eq.s32.totalorder %s63, 0
    %s66 = sadd.s32 %s65, 1
    %s67 = scalar_select %p64, %s65, %s66
    %p70 = pneg %p64
    %p71 = scmp.eq.s32.totalorder %s8, 1
    %p72 = por %p70, %p71
    %p73 = scmp.ne.s32.totalorder %s65, %s68
    %p74 = scmp.eq.s32.totalorder %s8, 0
    %p75 = por %p73, %p74
    %p76 = scmp.ne.s32.totalorder %s65, %s68
    %p77 = scmp.eq.s32.totalorder %s13, 1
    %p78 = por %p76, %p77
    %p79 = scmp.ne.s32.totalorder %s68, %s69
    %p80 = scmp.eq.s32.totalorder %s13, 0
    %p81 = por %p79, %p80
    %p82 = scmp.ne.s32.totalorder %s68, %s69
    %p83 = scmp.eq.s32.totalorder %s14, 1
    %p84 = por %p82, %p83
    %p86 = scmp.ne.s32.totalorder %s69, %s85
    %p87 = scmp.eq.s32.totalorder %s14, 0
    %p88 = por %p86, %p87
    %s89 = ssub.s32 %s15, %s34
    %s90 = ssub.s32 %s16, %s30
    %s91 = sor.u32 %s89, %s90
    %p92 = scmp.eq.s32.totalorder %s91, 0
    %s94 = sadd.s32 %s93, 1
    %s95 = scalar_select %p92, %s93, %s94
    %p98 = pneg %p92
    %p99 = scmp.eq.s32.totalorder %s8, 1
    %p100 = por %p98, %p99
    %p101 = scmp.ne.s32.totalorder %s93, %s96
    %p102 = scmp.eq.s32.totalorder %s8, 0
    %p103 = por %p101, %p102
    %p104 = scmp.ne.s32.totalorder %s93, %s96
    %p105 = scmp.eq.s32.totalorder %s13, 1
    %p106 = por %p104, %p105
    %p107 = scmp.ne.s32.totalorder %s96, %s97
    %p108 = scmp.eq.s32.totalorder %s13, 0
    %p109 = por %p107, %p108
    %p110 = scmp.ne.s32.totalorder %s96, %s97
    %p111 = scmp.eq.s32.totalorder %s14, 1
    %p112 = por %p110, %p111
    %p114 = scmp.ne.s32.totalorder %s97, %s113
    %p115 = scmp.eq.s32.totalorder %s14, 0
    %p116 = por %p114, %p115
    %p117 = scmp.le.s32.totalorder 1, %s8
    %p118 = scmp.lt.s32.totalorder %s8, 3
    %p119 = pnand %p117, %p118
    %p120 = pneg %p119
    // Predicated region
    $region9: #{disc_block_forward.1} parent=5 // pred_check
      _
    $region10: #{disc_block_forward.1} parent=5 // pred_check_branch
      %122 = sbr.rel (%p119) target = $region12
    $region11: #{disc_block_forward.1} parent=5 // pred_region
      %s123 = ssub.s32 %s8, 1
      // Predicated region
      $region13: #{disc_block_forward.1} parent=11 // pred_check
        %p124 = pneg %p81
      $region14: #{disc_block_forward.1} parent=11 // pred_check_branch
        %126 = sbr.rel (%p124) target = $region16
      $region15: #{disc_block_forward.1} parent=11 // pred_region
        %p127 = scmp.lt.s32.totalorder %s19, 0
        %s128 = scalar_select %p127, %s19, 0
        %s129 = smul.addr %s128, 8
        %s130 = scalar_lea.vmem %s1, %s129
      $region16: #{disc_block_forward.1} parent=11 // pred_fallthru
        _
    $region12: #{disc_block_forward.1} parent=5 // pred_fallthru
      _
    %p131 = scmp.lt.s32.totalorder %s8, 2
    // Predicated region
    $region17: #{disc_block_forward.1} parent=5 // pred_check
      %p132 = pneg %p131
    $region18: #{disc_block_forward.1} parent=5 // pred_check_branch
      %134 = sbr.rel (%p132) target = $region20
    $region19: #{disc_block_forward.1} parent=5 // pred_region
      // Predicated region
      $region21: #{disc_block_forward.1} parent=19 // pred_check
        %p135 = pneg %p49
      $region22: #{disc_block_forward.1} parent=19 // pred_check_branch
        %137 = sbr.rel (%p135) target = $region24
      $region23: #{disc_block_forward.1} parent=19 // pred_region
        %p138 = scmp.lt.s32.totalorder %s15, 1
        %s139 = scalar_select %p138, %s15, 1
        %p140 = scmp.lt.s32.totalorder %s17, 0
        %s141 = scalar_select %p140, %s17, 0
        %s142 = smul.addr %s141, 8
        %s143 = smul.addr %s139, 8
        %s144 = sadd.s32 %s142, %s143
        %s145 = smul.addr %s144, 8
        %s146 = scalar_lea.vmem %s0, %s145
      $region24: #{disc_block_forward.1} parent=19 // pred_fallthru
        _
    $region20: #{disc_block_forward.1} parent=5 // pred_fallthru
      _
    %p147 = scmp.le.s32.totalorder 1, %s8
    %p148 = scmp.lt.s32.totalorder %s8, 3
    %p149 = pnand %p147, %p148
    %p150 = pneg %p149
    // Predicated region
    $region25: #{disc_block_forward.1} parent=5 // pred_check
      _
    $region26: #{disc_block_forward.1} parent=5 // pred_check_branch
      %152 = sbr.rel (%p149) target = $region28
    $region27: #{disc_block_forward.1} parent=5 // pred_region
      %s153 = ssub.s32 %s8, 1
      %p154 = scmp.lt.s32.totalorder %s18, 1
      %s155 = scalar_select %p154, %s18, 1
      %p156 = scmp.lt.s32.totalorder %s20, 0
      %s157 = scalar_select %p156, %s20, 0
      %s158 = smul.addr %s157, 8
      %s159 = smul.addr %s155, 8
      %s160 = sadd.s32 %s158, %s159
      %s161 = smul.addr %s160, 8
      %s162 = scalar_lea.vmem %s0, %s161
      %p163 = pneg %p55
      %p164 = pneg %p52
      %p165 = scmp.lt.s32.totalorder %s19, 0
      %s166 = scalar_select %p165, %s19, 0
      %s167 = smul.addr %s166, 8
      %s168 = scalar_lea.vmem %s1, %s167
      %p169 = pneg %p81
      %p170 = pneg %p78
      %p171 = pneg %p109
      %p172 = pneg %p106
      %p173 = scmp.lt.s32.totalorder %s18, 1
      %s174 = scalar_select %p173, %s18, 1
      %p175 = scmp.lt.s32.totalorder %s19, 0
      %s176 = scalar_select %p175, %s19, 0
      %s177 = sadd.s32 %s176, %s174
      %s178 = smul.addr %s177, 8
      %s179 = scalar_lea.vmem %s2, %s178
      %p180 = scmp.lt.s32.totalorder %s18, 1
      %s181 = scalar_select %p180, %s18, 1
      %p182 = scmp.lt.s32.totalorder %s20, 0
      %s183 = scalar_select %p182, %s20, 0
      %s184 = smul.addr %s183, 8
      %s185 = smul.addr %s181, 8
      %s186 = sadd.s32 %s184, %s185
      %s187 = smul.addr %s186, 8
      %s188 = scalar_lea.vmem %s0, %s187
      %p189 = scmp.lt.s32.totalorder %s19, 0
      %s190 = scalar_select %p189, %s19, 0
      %s191 = smul.addr %s190, 8
      %s192 = scalar_lea.vmem %s1, %s191
      %p193 = scmp.lt.s32.totalorder %s18, 1
      %s194 = scalar_select %p193, %s18, 1
      %p195 = scmp.lt.s32.totalorder %s19, 0
      %s196 = scalar_select %p195, %s19, 0
      %s197 = sadd.s32 %s196, %s194
      %s198 = smul.addr %s197, 8
      %s199 = scalar_lea.vmem %s2, %s198
      %p200 = scmp.eq.s32.totalorder %s20, 0
      // Predicated region
      $region29: #{disc_block_forward.1} parent=27 // pred_check
        %p201 = pneg %p200
      $region30: #{disc_block_forward.1} parent=27 // pred_check_branch
        %203 = sbr.rel (%p201) target = $region32
      $region31: #{disc_block_forward.1} parent=27 // pred_region
        %vm204 = vcmask 7168
        %205 = vst.msk [vmem:[#allocation3] sm:$0xff] %vm204, 0.0
      $region32: #{disc_block_forward.1} parent=27 // pred_fallthru
        _
      %v206 = vld [vmem:[%s188] sm:$0xff]
      %vm207 = vcmask 523264
      %208 = vst.msk [vmem:[#allocation2] sm:$0xff] %vm207, %v206
      %v209 = vld [vmem:[%s188 + $0x10] sm:$0xff]
      %210 = vst.msk [vmem:[#allocation2 + $0x8] sm:$0xff] %vm207, %v209
      %v211 = vld [vmem:[%s188 + $0x20] sm:$0xff]
      %212 = vst.msk [vmem:[#allocation2 + $0x10] sm:$0xff] %vm207, %v211
      %v213 = vld [vmem:[%s188 + $0x30] sm:$0xff]
      %214 = vst.msk [vmem:[#allocation2 + $0x18] sm:$0xff] %vm207, %v213
      %v215 = vld [vmem:[%s188 + $0x8] sm:$0xff]
      %216 = vst.msk [vmem:[#allocation2 + $0x20] sm:$0xff] %vm207, %v215
      %v217 = vld [vmem:[%s188 + $0x18] sm:$0xff]
      %218 = vst.msk [vmem:[#allocation2 + $0x28] sm:$0xff] %vm207, %v217
      %v219 = vld [vmem:[%s188 + $0x28] sm:$0xff]
      %220 = vst.msk [vmem:[#allocation2 + $0x30] sm:$0xff] %vm207, %v219
      %v221 = vld [vmem:[%s188 + $0x38] sm:$0xff]
      %222 = vst.msk [vmem:[#allocation2 + $0x38] sm:$0xff] %vm207, %v221
      %v223 = vld [vmem:[%s188] sm:$0xff]
      %225 = vrot.lane.b32.xlu0 %v223, 120
      %v226 = vpop.permute.xlu0 %225
      %228 = vst.msk [vmem:[#allocation2 + $0x40] sm:$0xff] %vm207, %v226
      %v229 = vld [vmem:[%s188 + $0x10] sm:$0xff]
      %231 = vrot.lane.b32.xlu0 %v229, 120
      %v232 = vpop.permute.xlu0 %231
      %234 = vst.msk [vmem:[#allocation2 + $0x48] sm:$0xff] %vm207, %v232
      %v235 = vld [vmem:[%s188 + $0x20] sm:$0xff]
      %237 = vrot.lane.b32.xlu0 %v235, 120
      %v238 = vpop.permute.xlu0 %237
      %240 = vst.msk [vmem:[#allocation2 + $0x50] sm:$0xff] %vm207, %v238
      %v241 = vld [vmem:[%s188 + $0x30] sm:$0xff]
      %243 = vrot.lane.b32.xlu0 %v241, 120
      %v244 = vpop.permute.xlu0 %243
      %246 = vst.msk [vmem:[#allocation2 + $0x58] sm:$0xff] %vm207, %v244
      %v247 = vld [vmem:[%s188 + $0x8] sm:$0xff]
      %249 = vrot.lane.b32.xlu0 %v247, 120
      %v250 = vpop.permute.xlu0 %249
      %252 = vst.msk [vmem:[#allocation2 + $0x60] sm:$0xff] %vm207, %v250
      %v253 = vld [vmem:[%s188 + $0x18] sm:$0xff]
      %255 = vrot.lane.b32.xlu0 %v253, 120
      %v256 = vpop.permute.xlu0 %255
      %258 = vst.msk [vmem:[#allocation2 + $0x68] sm:$0xff] %vm207, %v256
      %v259 = vld [vmem:[%s188 + $0x28] sm:$0xff]
      %261 = vrot.lane.b32.xlu0 %v259, 120
      %v262 = vpop.permute.xlu0 %261
      %264 = vst.msk [vmem:[#allocation2 + $0x70] sm:$0xff] %vm207, %v262
      %v265 = vld [vmem:[%s188 + $0x38] sm:$0xff]
      %267 = vrot.lane.b32.xlu0 %v265, 120
      %v268 = vpop.permute.xlu0 %267
      %270 = vst.msk [vmem:[#allocation2 + $0x78] sm:$0xff] %vm207, %v268
      %v271 = vld [vmem:[%s192] sm:$0xff]
      %v272 = vld [vmem:[#allocation2] sm:$0xff]
      %v273 = vld [vmem:[#allocation2 + $0x8] sm:$0xff]
      %v274 = vld [vmem:[#allocation2 + $0x10] sm:$0xff]
      %v275 = vld [vmem:[#allocation2 + $0x18] sm:$0xff]
      %v276 = vld [vmem:[#allocation2 + $0x20] sm:$0xff]
      %v277 = vld [vmem:[#allocation2 + $0x28] sm:$0xff]
      %v278 = vld [vmem:[#allocation2 + $0x30] sm:$0xff]
      %v279 = vld [vmem:[#allocation2 + $0x38] sm:$0xff]
      %v280 = vld [vmem:[#allocation2 + $0x40] sm:$0xff]
      %v281 = vld [vmem:[#allocation2 + $0x48] sm:$0xff]
      %v282 = vld [vmem:[#allocation2 + $0x50] sm:$0xff]
      %v283 = vld [vmem:[#allocation2 + $0x58] sm:$0xff]
      %v284 = vld [vmem:[#allocation2 + $0x60] sm:$0xff]
      %v285 = vld [vmem:[#allocation2 + $0x68] sm:$0xff]
      %v286 = vld [vmem:[#allocation2 + $0x70] sm:$0xff]
      %v287 = vld [vmem:[#allocation2 + $0x78] sm:$0xff]
      %288 = vmatprep.subr.mxu0 0.0
      %289 = vmatpush1.msra.mxu0 %v272
      %290 = vmatprep.subr.mxu0 0.0
      %291 = vmatpush1.msra.mxu0 %v273
      %292 = vmatprep.subr.mxu0 0.0
      %293 = vmatpush1.msra.mxu0 %v274
      %294 = vmatprep.subr.mxu0 0.0
      %295 = vmatpush1.msra.mxu0 %v275
      %296 = vmatprep.subr.mxu0 0.0
      %297 = vmatpush1.msra.mxu0 %v276
      %298 = vmatprep.subr.mxu0 0.0
      %299 = vmatpush1.msra.mxu0 %v277
      %300 = vmatprep.subr.mxu0 0.0
      %301 = vmatpush1.msra.mxu0 %v278
      %302 = vmatprep.subr.mxu0 0.0
      %303 = vmatpush1.msra.mxu0 %v279
      %304 = vmatprep.subr.mxu0 0.0
      %305 = vmatpush1.msra.mxu0 %v280
      %306 = vmatprep.subr.mxu0 0.0
      %307 = vmatpush1.msra.mxu0 %v281
      %308 = vmatprep.subr.mxu0 0.0
      %309 = vmatpush1.msra.mxu0 %v282
      %310 = vmatprep.subr.mxu0 0.0
      %311 = vmatpush1.msra.mxu0 %v283
      %312 = vmatprep.subr.mxu0 0.0
      %313 = vmatpush1.msra.mxu0 %v284
      %314 = vmatprep.subr.mxu0 0.0
      %315 = vmatpush1.msra.mxu0 %v285
      %316 = vmatprep.subr.mxu0 0.0
      %317 = vmatpush1.msra.mxu0 %v286
      %318 = vmatprep.subr.mxu0 0.0
      %319 = vmatpush1.msra.mxu0 %v287
      %320 = vmatprep.subr.mxu0 0.0
      %321 = vmatpush1.msra.mxu0 0.0
      %322 = vmatprep.subr.mxu0 0.0
      %323 = vmatpush1.msra.mxu0 0.0
      %324 = vmatprep.subr.mxu0 0.0
      %325 = vmatpush1.msra.mxu0 0.0
      %326 = vmatprep.subr.mxu0 0.0
      %327 = vmatpush1.msra.mxu0 0.0
      %328 = vmatprep.subr.mxu0 0.0
      %329 = vmatpush1.msra.mxu0 0.0
      %330 = vmatprep.subr.mxu0 0.0
      %331 = vmatpush1.msra.mxu0 0.0
      %332 = vmatprep.subr.mxu0 0.0
      %333 = vmatpush1.msra.mxu0 0.0
      %334 = vmatprep.subr.mxu0 0.0
      %335 = vmatpush1.msra.mxu0 0.0
      %336 = vmatprep.subr.mxu0 0.0
      %337 = vmatpush1.msra.mxu0 0.0
      %338 = vmatprep.subr.mxu0 0.0
      %339 = vmatpush1.msra.mxu0 0.0
      %340 = vmatprep.subr.mxu0 0.0
      %341 = vmatpush1.msra.mxu0 0.0
      %342 = vmatprep.subr.mxu0 0.0
      %343 = vmatpush1.msra.mxu0 0.0
      %344 = vmatprep.subr.mxu0 0.0
      %345 = vmatpush1.msra.mxu0 0.0
      %346 = vmatprep.subr.mxu0 0.0
      %347 = vmatpush1.msra.mxu0 0.0
      %348 = vmatprep.subr.mxu0 0.0
      %349 = vmatpush1.msra.mxu0 0.0
      %350 = vmatprep.subr.mxu0 0.0
      %351 = vmatpush1.msra.mxu0 0.0
      %352 = vmatprep.mubr.f32.mxu0 0.0
      %353 = vmatmul.mubr.f32.gmra.mrb[0].mxu0 %v271
      %v354 = vpop.f32.mrb[0].mxu0
      %v355 = vadd.f32 0.0, %v354
      %v356 = vpop.f32.mrb[0].mxu0
      %357 = vdwg.mxu0
      %v358 = vld [vmem:[#allocation3] sm:$0xff]
      %v359 = vsel %vm207, %v355, 0.0
      %360 = vadd.xlane.f32.xlu0 %v359
      %v361 = vpop.xlane.xlu0 %360
      %v362 = vadd.f32 %v358, %v361
      %vm363 = vcmask 7168
      %364 = vst.msk [vmem:[#allocation3] sm:$0xff] %vm363, %v362
      // Predicated region
      $region33: #{disc_block_forward.1} parent=27 // pred_check
        %p365 = pneg %p200
      $region34: #{disc_block_forward.1} parent=27 // pred_check_branch
        %367 = sbr.rel (%p365) target = $region36
      $region35: #{disc_block_forward.1} parent=27 // pred_region
        %v368 = vld [vmem:[#allocation3] sm:$0xff]
        %v369 = vmul.f32 %v368, 0.015625
        %371 = vset.pattern.permute.xlu0 0
        %372 = vperm.xlu0 %371, %v369
        %v373 = vpop.permute.xlu0 %372
        %v375 = vsub.f32 %v355, %v373
        %v376 = vmul.f32 %v375, %v375
        %v377 = vsel %vm207, %v376, 0.0
        %378 = vadd.xlane.f32.xlu0 %v377
        %v379 = vpop.xlane.xlu0 %378
        %v380 = vmul.f32 %v379, 0.015625
        %v381 = vmax.f32 %v380, 0.0
        %v382 = vadd.f32 %v381, 1e-05
        %v383 = vrsqrt.pop %v382
        %v384 = vmul.f32 %v375, %v383
        %vm385 = vcmp.ge.f32.partialorder %v384, 0.0
        %v386 = vmul.f32 %v384, 0.2
        %v387 = vsel %vm385, %v384, %v386
        %388 = vst.msk [vmem:[%s199] sm:$0xff] %vm207, %v387
      $region36: #{disc_block_forward.1} parent=27 // pred_fallthru
        _
      %p389 = scmp.lt.s32.totalorder %s18, 1
      %s390 = scalar_select %p389, %s18, 1
      %p391 = scmp.lt.s32.totalorder %s19, 0
      %s392 = scalar_select %p391, %s19, 0
      %s393 = sadd.s32 %s392, %s390
      %s394 = smul.addr %s393, 8
      %s395 = scalar_lea.vmem %s2, %s394
      // Predicated region
      $region37: #{disc_block_forward.1} parent=27 // pred_check
        %p396 = pneg %p106
      $region38: #{disc_block_forward.1} parent=27 // pred_check_branch
        %398 = sbr.rel (%p396) target = $region40
      $region39: #{disc_block_forward.1} parent=27 // pred_region
        _
      $region40: #{disc_block_forward.1} parent=27 // pred_fallthru
        _
    $region28: #{disc_block_forward.1} parent=5 // pred_fallthru
      _
    %p399 = scmp.le.s32.totalorder 2, %s8
    // Predicated region
    $region41: #{disc_block_forward.1} parent=5 // pred_check
      %p400 = pneg %p399
    $region42: #{disc_block_forward.1} parent=5 // pred_check_branch
      %402 = sbr.rel (%p400) target = $region44
    $region43: #{disc_block_forward.1} parent=5 // pred_region
      %s403 = ssub.s32 %s8, 2
      // Predicated region
      $region45: #{disc_block_forward.1} parent=43 // pred_check
        %p404 = pneg %p112
      $region46: #{disc_block_forward.1} parent=43 // pred_check_branch
        %406 = sbr.rel (%p404) target = $region48
      $region47: #{disc_block_forward.1} parent=43 // pred_region
        %p407 = scmp.lt.s32.totalorder %s21, 1
        %s408 = scalar_select %p407, %s21, 1
        %p409 = scmp.lt.s32.totalorder %s22, 0
        %s410 = scalar_select %p409, %s22, 0
        %s411 = sadd.s32 %s410, %s408
        %s412 = smul.addr %s411, 8
        %s413 = scalar_lea.vmem %s2, %s412
      $region48: #{disc_block_forward.1} parent=43 // pred_fallthru
        _
    $region44: #{disc_block_forward.1} parent=5 // pred_fallthru
      _
  $region6: #{disc_block_forward.1} parent=0 // loop_footer
    %s12 = sadd.s32 1, %s8
  $region7: #{disc_block_forward.1} parent=0 // loop_footer_branch
    %7 = sbr.rel target = $region3
  $region8: #{disc_block_forward.1} parent=0 // loop_exit
    _

</llo_original>
